<compile_context>
chip_gen: v5e
topology: v5e:2x2
jax: 0.10.0
libtpu: 0.0.40
codegen_flags: <defaults>
</compile_context>

<pallas_src>
import jax
import jax.numpy as jnp
from jax.experimental import pallas as pl
from jax.experimental.pallas import tpu as pltpu

_MiB = 1024 * 1024


def _round_up(x, m):
    return (x + m - 1) // m * m


def _patch_embed_kernel(x_ref, w_ref, bp_ref, o_ref):
    # x_ref : (bt*Sp, Kp)  zero-padded flattened patches (row 0 of each image is all zeros -> cls row)
    # w_ref : (Kp, Et)     conv weight slab (resident across the whole grid when Et == Ep)
    # bp_ref: (Sp, Et)     fused additive term: row 0 = cls + pos[0]; rows 1..N = bias + pos; pad rows = 0
    # o_ref : (bt, Sp, Et) output block
    bt, Sp, Et = o_ref.shape
    # Single fused MXU matmul per grid step (M = bt*Sp rows), f32 accumulate.
    acc = jnp.dot(x_ref[...], w_ref[...], preferred_element_type=jnp.float32)  # (bt*Sp, Et)
    # Sp % 8 == 0 and Et % 128 == 0, so this reshape never crosses an (8,128) tile -> free relayout.
    acc = acc.reshape(bt, Sp, Et) + bp_ref[...][None, :, :]
    o_ref[...] = acc.astype(o_ref.dtype)


def _vmem_budget_and_phys():
    """Generation-gated VMEM budget for the double-buffered working set."""
    try:
        phys = pltpu.get_tpu_info().vmem_capacity_bytes
    except Exception:
        phys = 64 * _MiB  # most conservative assumption (v7x: 64 MiB per TensorCore)
    if phys <= 64 * _MiB:          # v7x
        budget = 44 * _MiB
    else:                          # v5e / v6e (128 MiB physical)
        budget = 80 * _MiB
    return budget, phys


def _pick_e_tile(Ep):
    # Prefer a single full-E slab (no patch re-reads).  Only tile truly huge E.
    if Ep <= 2048:
        return Ep
    for cand in (2048, 1024, 512, 256, 128):
        if Ep % cand == 0:
            return cand
    return Ep


def _footprint(bt, Sp, Kp, et, in_itemsize, out_itemsize):
    x_tile = bt * Sp * Kp * in_itemsize
    w_tile = Kp * et * in_itemsize
    bp_tile = Sp * et * 4
    o_tile = bt * Sp * et * out_itemsize
    acc_tmp = bt * Sp * et * 4                      # in-kernel f32 accumulator
    return 2 * (x_tile + w_tile + bp_tile + o_tile) + acc_tmp


def _pick_batch_tile(B, Sp, Kp, et, in_itemsize, out_itemsize, budget):
    divisors = [d for d in range(1, B + 1) if B % d == 0]
    feasible = [d for d in divisors
                if d * Sp <= 4096
                and _footprint(d, Sp, Kp, et, in_itemsize, out_itemsize) <= budget]
    if not feasible:
        feasible = [1]
    # v7x TC sharding: prefer an even (>=2) number of batch-grid steps so neither core idles.
    even = [d for d in feasible if (B // d) >= 2 and (B // d) % 2 == 0]
    atleast2 = [d for d in feasible if (B // d) >= 2]
    if even:
        bt = max(even)
    elif atleast2:
        bt = max(atleast2)
    else:
        bt = max(feasible)
    return bt


def patch_embedding(x, conv_w, conv_b, cls_token, positions, patch_size,
                    *, compute_dtype=jnp.bfloat16, out_dtype=jnp.float32):
    """x: (B, C, H, W). conv_w: (E, C, P, P), conv_b: (E,), cls_token: (1, 1, E),
    positions: (N+1, E). Returns (B, N+1, E) in out_dtype.
    compute_dtype feeds the MXU (bf16 is native on all TPU generations); accumulate/adds stay f32."""
    B, C, H, W = x.shape
    P = patch_size
    Hp, Wp = H // P, W // P
    N = Hp * Wp
    S = N + 1
    E = conv_w.shape[0]
    K = C * P * P

    Sp = _round_up(S, 8)          # 8-aligned sublanes; cls row + trailing zero pad rows
    Kp = _round_up(K, 128)        # lane-dense contraction dim
    Ep = _round_up(E, 128)        # lane-dense output dim (full-width unmasked stores)

    # XLA glue: unfold NCHW -> (B, N, K) in (c, kh, kw) order (matches Conv2d weight flattening),
    # then pad: 1 leading zero row (cls), Sp-S trailing zero rows, Kp-K zero columns.
    # TODO(synk): this unfold+pad is an extra HBM round trip; it could be fused into the kernel
    # with an (Hp, Wp) patch-tile BlockSpec at the cost of an in-kernel relayout.
    patches = x.reshape(B, C, Hp, P, Wp, P).transpose(0, 2, 4, 1, 3, 5).reshape(B, N, K)
    patches = jnp.pad(patches, ((0, 0), (1, Sp - S), (0, Kp - K)))        # (B, Sp, Kp)
    patches = patches.reshape(B * Sp, Kp).astype(compute_dtype)           # fused-matmul layout

    # Weight slab (K, E) zero-padded to (Kp, Ep).
    w_mat = conv_w.reshape(E, K).T                                        # (K, E)
    w_mat = jnp.pad(w_mat, ((0, Kp - K), (0, Ep - E))).astype(compute_dtype)

    # Fused additive term (f32 so the epilogue add is f32 on every chip incl. v5e):
    #   row 0      = cls + pos[0]         (conv bias is NOT applied to the cls row)
    #   rows 1..N  = conv bias + pos[1..N]
    #   pad rows / pad E columns = 0
    bias_pos = jnp.zeros((Sp, Ep), jnp.float32)
    bias_pos = bias_pos.at[0, :E].set(cls_token.reshape(E) + positions[0])
    bias_pos = bias_pos.at[1:S, :E].set(positions[1:] + conv_b[None, :])

    in_itemsize = jnp.dtype(compute_dtype).itemsize
    out_itemsize = jnp.dtype(out_dtype).itemsize

    budget, phys = _vmem_budget_and_phys()
    et = _pick_e_tile(Ep)
    bt = _pick_batch_tile(B, Sp, Kp, et, in_itemsize, out_itemsize, budget)
    e_tiles = Ep // et
    b_tiles = B // bt
    grid = (b_tiles, e_tiles)     # B outermost: patches DMA'd once; only the small W slab re-streams if E is tiled.

    footprint = _footprint(bt, Sp, Kp, et, in_itemsize, out_itemsize)
    vmem_limit = int(min(phys - 2 * _MiB, max(32 * _MiB, footprint + 16 * _MiB)))

    w_reads = 1 if e_tiles == 1 else b_tiles
    cost = pl.CostEstimate(
        flops=2 * B * Sp * Kp * Ep,
        transcendentals=0,
        bytes_accessed=(B * Sp * Kp * in_itemsize
                        + w_reads * Kp * Ep * in_itemsize
                        + w_reads * Sp * Ep * 4
                        + B * Sp * Ep * out_itemsize))

    out = pl.pallas_call(
        _patch_embed_kernel,
        out_shape=jax.ShapeDtypeStruct((B, Sp, Ep), out_dtype),
        grid=grid,
        in_specs=[
            pl.BlockSpec((bt * Sp, Kp), lambda b, e: (b, 0)),   # ignores e -> no patch re-read
            pl.BlockSpec((Kp, et), lambda b, e: (0, e)),
            pl.BlockSpec((Sp, et), lambda b, e: (0, e)),
        ],
        out_specs=pl.BlockSpec((bt, Sp, et), lambda b, e: (b, 0, e)),
        compiler_params=pltpu.CompilerParams(
            dimension_semantics=("parallel", "parallel"),
            vmem_limit_bytes=vmem_limit),
        cost_estimate=cost,
    )(patches, w_mat, bias_pos)

    return out[:, :S, :E]


def _reference(x, conv_w, conv_b, cls_token, positions, patch_size):
    """Pure-JAX reference reproducing the PyTorch forward semantics."""
    B, C, H, W = x.shape
    P = patch_size
    Hp, Wp = H // P, W // P
    E = conv_w.shape[0]
    patches = x.reshape(B, C, Hp, P, Wp, P).transpose(0, 2, 4, 1, 3, 5)
    patches = patches.reshape(B, Hp * Wp, C * P * P)
    proj = patches @ conv_w.reshape(E, -1).T + conv_b                    # (B, N, E)
    cls = jnp.broadcast_to(cls_token.reshape(1, 1, E), (B, 1, E))
    y = jnp.concatenate([cls, proj], axis=1)                             # (B, N+1, E)
    return y + positions[None, :, :]


if __name__ == "__main__":
    # Small shapes consistent with the module: img_size=16, patch_size=8,
    # in_channels=4, emb_size=32, batch=2  ->  N = (16/8)^2 = 4 patches, seq = 5.
    B, C, IMG, P, E = 2, 4, 16, 8, 32
    N = (IMG // P) ** 2

    key = jax.random.PRNGKey(0)
    kx, kw, kb, kc, kp = jax.random.split(key, 5)
    x = jax.random.normal(kx, (B, C, IMG, IMG), dtype=jnp.float32)
    conv_w = jax.random.normal(kw, (E, C, P, P), dtype=jnp.float32) * 0.02
    conv_b = jax.random.normal(kb, (E,), dtype=jnp.float32) * 0.02
    cls_token = jax.random.normal(kc, (1, 1, E), dtype=jnp.float32)
    positions = jax.random.normal(kp, (N + 1, E), dtype=jnp.float32)

    ref = _reference(x, conv_w, conv_b, cls_token, positions, P)

    # Default path: bf16 MXU inputs (v5e/v6e/v7x native), f32 accumulate/epilogue.
    out = patch_embedding(x, conv_w, conv_b, cls_token, positions, P)
    out = jax.block_until_ready(out)
    assert out.shape == (B, N + 1, E), out.shape
    assert jnp.allclose(out, ref, atol=2e-2, rtol=2e-2), \
        float(jnp.max(jnp.abs(out - ref)))

    # f32 MXU path: tight tolerance.
    out_f32 = patch_embedding(x, conv_w, conv_b, cls_token, positions, P,
                              compute_dtype=jnp.float32)
    out_f32 = jax.block_until_ready(out_f32)
    assert jnp.allclose(out_f32, ref, atol=1e-4, rtol=1e-4), \
        float(jnp.max(jnp.abs(out_f32 - ref)))

    print("KERNEL_OK")
</pallas_src>

<mosaic_0001>
module attributes {stable_mosaic.version = 11 : i64} {
  func.func @_patch_embed_kernel(%arg0: i32, %arg1: i32, %arg2: memref<8x256xbf16, #tpu.memory_space<vmem>>, %arg3: memref<256x128xbf16, #tpu.memory_space<vmem>>, %arg4: memref<8x128xf32, #tpu.memory_space<vmem>>, %arg5: memref<1x8x128xf32, #tpu.memory_space<vmem>>) attributes {dimension_semantics = [#tpu.dimension_semantics<parallel>, #tpu.dimension_semantics<parallel>], iteration_bounds = array<i64: 2, 1>, scalar_prefetch = 0 : i64, scratch_operands = 0 : i64, tpu.core_type = #tpu.core_type<tc>, window_params = [{transform_indices = @transform_0, window_bounds = array<i64: 8, 256>}, {transform_indices = @transform_1, window_bounds = array<i64: 256, 128>}, {transform_indices = @transform_2, window_bounds = array<i64: 8, 128>}, {transform_indices = @transform_3, window_bounds = array<i64: 1, 8, 128>}]} {
    %c0 = arith.constant 0 : index
    %c0_0 = arith.constant 0 : index
    %0 = vector.load %arg2[%c0, %c0_0] : memref<8x256xbf16, #tpu.memory_space<vmem>>, vector<8x256xbf16>
    %c0_1 = arith.constant 0 : index
    %c0_2 = arith.constant 0 : index
    %1 = vector.load %arg3[%c0_1, %c0_2] : memref<256x128xbf16, #tpu.memory_space<vmem>>, vector<256x128xbf16>
    %cst = arith.constant dense<0.000000e+00> : vector<8x128xf32>
    %2 = tpu.matmul %0, %1, %cst {dimension_numbers = #tpu.dot_dimension_numbers<[1], [0], [0], [1], [0, 0, 1, 1], [], []>} : vector<8x256xbf16>, vector<256x128xbf16>, vector<8x128xf32> -> vector<8x128xf32>
    %3 = vector.shape_cast %2 : vector<8x128xf32> to vector<1x8x128xf32>
    %c0_3 = arith.constant 0 : index
    %c0_4 = arith.constant 0 : index
    %4 = vector.load %arg4[%c0_3, %c0_4] : memref<8x128xf32, #tpu.memory_space<vmem>>, vector<8x128xf32>
    %5 = vector.shape_cast %4 : vector<8x128xf32> to vector<1x8x128xf32>
    %6 = arith.addf %3, %5 : vector<1x8x128xf32>
    %c0_5 = arith.constant 0 : index
    %c0_6 = arith.constant 0 : index
    %c0_7 = arith.constant 0 : index
    %7 = vector.load %arg5[%c0_5, %c0_6, %c0_7] : memref<1x8x128xf32, #tpu.memory_space<vmem>>, vector<1x8x128xf32>
    tpu.vector_store %arg5[%c0_5, %c0_6, %c0_7], %6 {strides = array<i32>} : memref<1x8x128xf32, #tpu.memory_space<vmem>>, vector<1x8x128xf32>,
    return
  }
  func.func @transform_0(%arg0: i32, %arg1: i32) -> (i32, i32) {
    %c0_i32 = arith.constant 0 : i32
    %c0_i32_0 = arith.constant 0 : i32
    return %arg0, %c0_i32 : i32, i32
  }
  func.func @transform_1(%arg0: i32, %arg1: i32) -> (i32, i32) {
    %c0_i32 = arith.constant 0 : i32
    %c0_i32_0 = arith.constant 0 : i32
    return %c0_i32, %arg1 : i32, i32
  }
  func.func @transform_2(%arg0: i32, %arg1: i32) -> (i32, i32) {
    %c0_i32 = arith.constant 0 : i32
    %c0_i32_0 = arith.constant 0 : i32
    return %c0_i32, %arg1 : i32, i32
  }
  func.func @transform_3(%arg0: i32, %arg1: i32) -> (i32, i32, i32) {
    %c0_i32 = arith.constant 0 : i32
    %c0_i32_0 = arith.constant 0 : i32
    return %arg0, %c0_i32, %arg1 : i32, i32, i32
  }
}

</mosaic_0001>

<llo_original>
// kernel: tpu_custom_call.1
$region0: #{tpu_custom_call.1}
  #allocation0 [shape = 'u32[]', space=smem, size = 0x4, offset = 0x4, fixed_abs, tag = 'smem constant byte address 0x4 - core index']
  #allocation1 [shape = 'u32[72,128]{1,0:T(1,128)}', space=vmem, size = 0x9000, scoped, tag = 'internal scratch']
  %s0 = inlined_call_operand.hbm [shape: bf16[16,256], index: 0, kind: input, shape index: {}]
  %s1 = inlined_call_operand.hbm [shape: bf16[256,128], index: 1, kind: input, shape index: {}]
  %s2 = inlined_call_operand.hbm [shape: f32[8,128], index: 2, kind: input, shape index: {}]
  %s3 = inlined_call_operand.hbm [shape: f32[2,8,128], index: 3, kind: output, shape index: {}]
  %s4 = sld [smem:[#allocation0]]
  $region57: #{tpu_custom_call.1} parent=0
    _
  %s6 = ssub.s32 1, %s4
  %s7 = scalar_select 0, %s6, %s4
  $region1: #{tpu_custom_call.1} parent=0
    #allocation2 [shape = 'u8[8192]{0}', space=vmem, size = 0x2000, scoped, tag = 'input window, operand 0']
    #allocation3 [shape = 's32[2]{0}', space=sflag, size = 0x8, scoped, tag = 'scoped memory for tpu_custom_call.1']
    #allocation4 [shape = 's32[2]{0}', space=sflag, size = 0x8, scoped, tag = 'scoped memory for tpu_custom_call.1']
    #allocation5 [shape = 'u8[65536]{0}', space=vmem, size = 0x10000, scoped, tag = 'input window, operand 1, single buffered']
    #allocation6 [shape = 's32[1]{0}', space=sflag, size = 0x4, scoped, tag = 'scoped memory for tpu_custom_call.1']
    #allocation7 [shape = 'u8[4096]{0}', space=vmem, size = 0x1000, scoped, tag = 'input window, operand 2, single buffered']
    #allocation8 [shape = 'u8[8192]{0}', space=vmem, size = 0x2000, scoped, tag = 'output window, operand 0']
    %8 = vsyncpa [#allocation3], 0
    %s9 = scalar_lea.sflag [#allocation3], 1
    %10 = vsyncpa %s9, 0
    %11 = vsyncpa [#allocation6], 0
    %12 = vsyncpa [#allocation4], 0
    %s13 = scalar_lea.sflag [#allocation4], 1
    %14 = vsyncpa %s13, 0
    loop: start=0, step=1, limit=4
    $region2: #{tpu_custom_call.1} parent=1 // loop_pre_header
      _
    $region3: #{tpu_custom_call.1} parent=1 // loop_header
      %s16 = sphi 0, %s20
      %p17 = scmp.ge.s32.totalorder %s16, 4
      %s23 = sphi 0, %s35
      %s24 = sphi 0, %s31
      %s25 = sphi 0, %s23
      %s26 = sphi 0, %s24
      %s27 = sphi 0, %s25
      %s28 = sphi 0, %s26
      %s38 = sphi 0, %s40
      %s41 = sphi 0, %s38
      %s42 = sphi 0, %s41
      %s58 = sphi 0, %s42
      %s64 = sphi 0, %s66
      %s67 = sphi 0, %s64
      %s68 = sphi 0, %s67
      %s84 = sphi 0, %s68
      %s90 = sphi 0, %s92
      %s93 = sphi 0, %s90
      %s94 = sphi 0, %s93
      %s110 = sphi 0, %s94
      %s118 = sphi 0, %s120
      %s121 = sphi 0, %s118
      %s122 = sphi 0, %s121
      %s138 = sphi 0, %s122
    $region4: #{tpu_custom_call.1} parent=1 // loop_header_branch
      %19 = sbr.rel (%p17) target = $region8
    $region5: #{tpu_custom_call.1} parent=1 // loop_body
      %s21 = ssub.s32 %s16, 1
      %s22 = ssub.s32 %s16, 2
      %s29 = sadd.s32 1, %s24
      %p30 = scmp.ge.s32.totalorder %s29, 1
      %s31 = scalar_select %p30, 0, %s29
      %s32 = sadd.s32 1, %s23
      %s33 = scalar_select %p30, %s32, %s23
      %p34 = scmp.ge.s32.totalorder %s33, 2
      %s35 = scalar_select %p34, 0, %s33
      %s36 = ssub.s32 %s23, %s35
      %p37 = scmp.eq.s32.totalorder %s36, 0
      %s39 = sadd.s32 %s38, 1
      %s40 = scalar_select %p37, %s38, %s39
      %p43 = pneg %p37
      %p44 = scmp.eq.s32.totalorder %s16, 1
      %p45 = por %p43, %p44
      %p46 = scmp.ne.s32.totalorder %s38, %s41
      %p47 = scmp.eq.s32.totalorder %s16, 0
      %p48 = por %p46, %p47
      %p49 = scmp.ne.s32.totalorder %s38, %s41
      %p50 = scmp.eq.s32.totalorder %s21, 1
      %p51 = por %p49, %p50
      %p52 = scmp.ne.s32.totalorder %s41, %s42
      %p53 = scmp.eq.s32.totalorder %s21, 0
      %p54 = por %p52, %p53
      %p55 = scmp.ne.s32.totalorder %s41, %s42
      %p56 = scmp.eq.s32.totalorder %s22, 1
      %p57 = por %p55, %p56
      %p59 = scmp.ne.s32.totalorder %s42, %s58
      %p60 = scmp.eq.s32.totalorder %s22, 0
      %p61 = por %p59, %p60
      %s62 = ssub.s32 %s24, %s31
      %p63 = scmp.eq.s32.totalorder %s62, 0
      %s65 = sadd.s32 %s64, 1
      %s66 = scalar_select %p63, %s64, %s65
      %p69 = pneg %p63
      %p70 = scmp.eq.s32.totalorder %s16, 1
      %p71 = por %p69, %p70
      %p72 = scmp.ne.s32.totalorder %s64, %s67
      %p73 = scmp.eq.s32.totalorder %s16, 0
      %p74 = por %p72, %p73
      %p75 = scmp.ne.s32.totalorder %s64, %s67
      %p76 = scmp.eq.s32.totalorder %s21, 1
      %p77 = por %p75, %p76
      %p78 = scmp.ne.s32.totalorder %s67, %s68
      %p79 = scmp.eq.s32.totalorder %s21, 0
      %p80 = por %p78, %p79
      %p81 = scmp.ne.s32.totalorder %s67, %s68
      %p82 = scmp.eq.s32.totalorder %s22, 1
      %p83 = por %p81, %p82
      %p85 = scmp.ne.s32.totalorder %s68, %s84
      %p86 = scmp.eq.s32.totalorder %s22, 0
      %p87 = por %p85, %p86
      %s88 = ssub.s32 %s24, %s31
      %p89 = scmp.eq.s32.totalorder %s88, 0
      %s91 = sadd.s32 %s90, 1
      %s92 = scalar_select %p89, %s90, %s91
      %p95 = pneg %p89
      %p96 = scmp.eq.s32.totalorder %s16, 1
      %p97 = por %p95, %p96
      %p98 = scmp.ne.s32.totalorder %s90, %s93
      %p99 = scmp.eq.s32.totalorder %s16, 0
      %p100 = por %p98, %p99
      %p101 = scmp.ne.s32.totalorder %s90, %s93
      %p102 = scmp.eq.s32.totalorder %s21, 1
      %p103 = por %p101, %p102
      %p104 = scmp.ne.s32.totalorder %s93, %s94
      %p105 = scmp.eq.s32.totalorder %s21, 0
      %p106 = por %p104, %p105
      %p107 = scmp.ne.s32.totalorder %s93, %s94
      %p108 = scmp.eq.s32.totalorder %s22, 1
      %p109 = por %p107, %p108
      %p111 = scmp.ne.s32.totalorder %s94, %s110
      %p112 = scmp.eq.s32.totalorder %s22, 0
      %p113 = por %p111, %p112
      %s114 = ssub.s32 %s23, %s35
      %s115 = ssub.s32 %s24, %s31
      %s116 = sor.u32 %s114, %s115
      %p117 = scmp.eq.s32.totalorder %s116, 0
      %s119 = sadd.s32 %s118, 1
      %s120 = scalar_select %p117, %s118, %s119
      %p123 = pneg %p117
      %p124 = scmp.eq.s32.totalorder %s16, 1
      %p125 = por %p123, %p124
      %p126 = scmp.ne.s32.totalorder %s118, %s121
      %p127 = scmp.eq.s32.totalorder %s16, 0
      %p128 = por %p126, %p127
      %p129 = scmp.ne.s32.totalorder %s118, %s121
      %p130 = scmp.eq.s32.totalorder %s21, 1
      %p131 = por %p129, %p130
      %p132 = scmp.ne.s32.totalorder %s121, %s122
      %p133 = scmp.eq.s32.totalorder %s21, 0
      %p134 = por %p132, %p133
      %p135 = scmp.ne.s32.totalorder %s121, %s122
      %p136 = scmp.eq.s32.totalorder %s22, 1
      %p137 = por %p135, %p136
      %p139 = scmp.ne.s32.totalorder %s122, %s138
      %p140 = scmp.eq.s32.totalorder %s22, 0
      %p141 = por %p139, %p140
      %p142 = scmp.le.s32.totalorder 1, %s16
      %p143 = scmp.lt.s32.totalorder %s16, 3
      %p144 = pnand %p142, %p143
      %p145 = pneg %p144
      // Predicated region
      $region9: #{tpu_custom_call.1} parent=5 // pred_check
        _
      $region10: #{tpu_custom_call.1} parent=5 // pred_check_branch
        %147 = sbr.rel (%p144) target = $region12
      $region11: #{tpu_custom_call.1} parent=5 // pred_region
        %s148 = ssub.s32 %s16, 1
        // Predicated region
        $region13: #{tpu_custom_call.1} parent=11 // pred_check
          %p149 = pneg %p80
        $region14: #{tpu_custom_call.1} parent=11 // pred_check_branch
          %151 = sbr.rel (%p149) target = $region16
        $region15: #{tpu_custom_call.1} parent=11 // pred_region
          %153 = vsyncadd [#allocation6], 0
          %s154 = smul.addr %s26, 4
          %s155 = scalar_lea.hbm %s1, %s154
          %s156 = sshll.u32 %s155, 4
          %s157 = int_to_ptr.hbm [resolvable:$true] %s156
          %s158 = sshll.u32 [#allocation5], 4
          %s159 = int_to_ptr.vmem [resolvable:$true] %s158
          %164 = dma.hbm_to_vmem [thread:$0]  %s157, 2048, %s159, [#allocation6], 64, 64, 4
        $region16: #{tpu_custom_call.1} parent=11 // pred_fallthru
          _
        // Predicated region
        $region17: #{tpu_custom_call.1} parent=11 // pred_check
          %p165 = pneg %p106
        $region18: #{tpu_custom_call.1} parent=11 // pred_check_branch
          %167 = sbr.rel (%p165) target = $region20
        $region19: #{tpu_custom_call.1} parent=11 // pred_region
          %169 = vsyncadd [#allocation6], 0
          %s170 = smul.addr %s26, 8
          %s171 = scalar_lea.hbm %s2, %s170
          %s173 = sshll.u32 %s171, 4
          %s174 = int_to_ptr.hbm [resolvable:$true] %s173
          %s175 = sshll.u32 [#allocation7], 4
          %s176 = int_to_ptr.vmem [resolvable:$true] %s175
          %178 = dma.hbm_to_vmem [thread:$0]  %s174, 128, %s176, [#allocation6]
        $region20: #{tpu_custom_call.1} parent=11 // pred_fallthru
          _
      $region12: #{tpu_custom_call.1} parent=5 // pred_fallthru
        _
      %p179 = scmp.lt.s32.totalorder %s16, 2
      // Predicated region
      $region21: #{tpu_custom_call.1} parent=5 // pred_check
        %p180 = pneg %p179
      $region22: #{tpu_custom_call.1} parent=5 // pred_check_branch
        %182 = sbr.rel (%p180) target = $region24
      $region23: #{tpu_custom_call.1} parent=5 // pred_region
        // Predicated region
        $region25: #{tpu_custom_call.1} parent=23 // pred_check
          %p183 = pneg %p48
        $region26: #{tpu_custom_call.1} parent=23 // pred_check_branch
          %185 = sbr.rel (%p183) target = $region28
        $region27: #{tpu_custom_call.1} parent=23 // pred_region
          %s186 = sand.u32 %s38, 1
          %s187 = scalar_lea.sflag [#allocation3], %s186
          %s188 = sand.u32 %s38, 1
          %s189 = smul.addr %s188, 8
          %s190 = scalar_lea.vmem [#allocation2], %s189
          %192 = vsyncadd %s187, 0
          %s193 = smul.addr %s23, 2
          %s194 = smul.addr %s193, 4
          %s195 = scalar_lea.hbm %s0, %s194
          %s197 = sshll.u32 %s195, 4
          %s198 = int_to_ptr.hbm [resolvable:$true] %s197
          %s199 = sshll.u32 %s190, 4
          %s200 = int_to_ptr.vmem [resolvable:$true] %s199
          %202 = dma.hbm_to_vmem [thread:$0]  %s198, 128, %s200, %s187
        $region28: #{tpu_custom_call.1} parent=23 // pred_fallthru
          _
      $region24: #{tpu_custom_call.1} parent=5 // pred_fallthru
        _
      %p203 = scmp.le.s32.totalorder 1, %s16
      %p204 = scmp.lt.s32.totalorder %s16, 3
      %p205 = pnand %p203, %p204
      %p206 = pneg %p205
      // Predicated region
      $region29: #{tpu_custom_call.1} parent=5 // pred_check
        _
      $region30: #{tpu_custom_call.1} parent=5 // pred_check_branch
        %208 = sbr.rel (%p205) target = $region32
      $region31: #{tpu_custom_call.1} parent=5 // pred_region
        %s209 = ssub.s32 %s16, 1
        %s210 = sand.u32 %s41, 1
        %s211 = scalar_lea.sflag [#allocation3], %s210
        %s212 = sand.u32 %s41, 1
        %s213 = smul.addr %s212, 8
        %s214 = scalar_lea.vmem [#allocation2], %s213
        // Predicated region
        $region33: #{tpu_custom_call.1} parent=31 // pred_check
          %p215 = pneg %p54
        $region34: #{tpu_custom_call.1} parent=31 // pred_check_branch
          %217 = sbr.rel (%p215) target = $region36
        $region35: #{tpu_custom_call.1} parent=31 // pred_region
          %219 = dma.done %s211, 128
        $region36: #{tpu_custom_call.1} parent=31 // pred_fallthru
          _
        // Predicated region
        $region37: #{tpu_custom_call.1} parent=31 // pred_check
          %p220 = pneg %p80
        $region38: #{tpu_custom_call.1} parent=31 // pred_check_branch
          %222 = sbr.rel (%p220) target = $region40
        $region39: #{tpu_custom_call.1} parent=31 // pred_region
          %224 = dma.done [#allocation6], 2048
        $region40: #{tpu_custom_call.1} parent=31 // pred_fallthru
          _
        // Predicated region
        $region41: #{tpu_custom_call.1} parent=31 // pred_check
          %p225 = pneg %p106
        $region42: #{tpu_custom_call.1} parent=31 // pred_check_branch
          %227 = sbr.rel (%p225) target = $region44
        $region43: #{tpu_custom_call.1} parent=31 // pred_region
          %229 = dma.done [#allocation6], 128
        $region44: #{tpu_custom_call.1} parent=31 // pred_fallthru
          _
        %s230 = sand.u32 %s41, 1
        %s231 = scalar_lea.sflag [#allocation3], %s230
        %s232 = sand.u32 %s41, 1
        %s233 = smul.addr %s232, 8
        %s234 = scalar_lea.vmem [#allocation2], %s233
        %p235 = pneg %p54
        %p236 = pneg %p51
        %p237 = pneg %p80
        %p238 = pneg %p77
        %p239 = pneg %p106
        %p240 = pneg %p103
        %p241 = pneg %p134
        %p242 = pneg %p131
        %s243 = sand.u32 %s121, 1
        %s244 = scalar_lea.sflag [#allocation4], %s243
        %s245 = sand.u32 %s121, 1
        %s246 = smul.addr %s245, 8
        %s247 = scalar_lea.vmem [#allocation8], %s246
        %v248 = vld [vmem:[%s214] sm:$0xff]
        %v249 = vld [vmem:[#allocation5] sm:$0xf]
        %v250 = vld [vmem:[#allocation5 + $0x4] sm:$0xf]
        %v251 = vld [vmem:[#allocation5 + $0x8] sm:$0xf]
        %v252 = vld [vmem:[#allocation5 + $0xc] sm:$0xf]
        %v253 = vld [vmem:[#allocation5 + $0x10] sm:$0xf]
        %v254 = vld [vmem:[#allocation5 + $0x14] sm:$0xf]
        %v255 = vld [vmem:[#allocation5 + $0x18] sm:$0xf]
        %v256 = vld [vmem:[#allocation5 + $0x1c] sm:$0xf]
        %v257 = vld [vmem:[#allocation5 + $0x20] sm:$0xf]
        %v258 = vld [vmem:[#allocation5 + $0x24] sm:$0xf]
        %v259 = vld [vmem:[#allocation5 + $0x28] sm:$0xf]
        %v260 = vld [vmem:[#allocation5 + $0x2c] sm:$0xf]
        %v261 = vld [vmem:[#allocation5 + $0x30] sm:$0xf]
        %v262 = vld [vmem:[#allocation5 + $0x34] sm:$0xf]
        %v263 = vld [vmem:[#allocation5 + $0x38] sm:$0xf]
        %v264 = vld [vmem:[#allocation5 + $0x3c] sm:$0xf]
        %v265 = vld [vmem:[#allocation5 + $0x40] sm:$0xf]
        %v266 = vld [vmem:[#allocation5 + $0x44] sm:$0xf]
        %v267 = vld [vmem:[#allocation5 + $0x48] sm:$0xf]
        %v268 = vld [vmem:[#allocation5 + $0x4c] sm:$0xf]
        %v269 = vld [vmem:[#allocation5 + $0x50] sm:$0xf]
        %v270 = vld [vmem:[#allocation5 + $0x54] sm:$0xf]
        %v271 = vld [vmem:[#allocation5 + $0x58] sm:$0xf]
        %v272 = vld [vmem:[#allocation5 + $0x5c] sm:$0xf]
        %v273 = vld [vmem:[#allocation5 + $0x60] sm:$0xf]
        %v274 = vld [vmem:[#allocation5 + $0x64] sm:$0xf]
        %v275 = vld [vmem:[#allocation5 + $0x68] sm:$0xf]
        %v276 = vld [vmem:[#allocation5 + $0x6c] sm:$0xf]
        %v277 = vld [vmem:[#allocation5 + $0x70] sm:$0xf]
        %v278 = vld [vmem:[#allocation5 + $0x74] sm:$0xf]
        %v279 = vld [vmem:[#allocation5 + $0x78] sm:$0xf]
        %v280 = vld [vmem:[#allocation5 + $0x7c] sm:$0xf]
        %v282 = vunpack.c.l.b16 %v248
        %v283 = vunpack.c.h.b16 %v248
        %v284 = vpack.c.b16 %v282, %v282
        %v285 = vpack.c.b16 %v283, %v283
        %v320 = vunpack.c.l.b16 %v249
        %v321 = vunpack.c.l.b16 %v250
        %v322 = vunpack.c.l.b16 %v251
        %v323 = vunpack.c.l.b16 %v252
        %v324 = vunpack.c.l.b16 %v253
        %v325 = vunpack.c.l.b16 %v254
        %v326 = vunpack.c.l.b16 %v255
        %v327 = vunpack.c.l.b16 %v256
        %v328 = vunpack.c.l.b16 %v257
        %v329 = vunpack.c.l.b16 %v258
        %v330 = vunpack.c.l.b16 %v259
        %v331 = vunpack.c.l.b16 %v260
        %v332 = vunpack.c.l.b16 %v261
        %v333 = vunpack.c.l.b16 %v262
        %v334 = vunpack.c.l.b16 %v263
        %v335 = vunpack.c.l.b16 %v264
        %v336 = vunpack.c.l.b16 %v265
        %v337 = vunpack.c.l.b16 %v266
        %v338 = vunpack.c.l.b16 %v267
        %v339 = vunpack.c.l.b16 %v268
        %v340 = vunpack.c.l.b16 %v269
        %v341 = vunpack.c.l.b16 %v270
        %v342 = vunpack.c.l.b16 %v271
        %v343 = vunpack.c.l.b16 %v272
        %v344 = vunpack.c.l.b16 %v273
        %v345 = vunpack.c.l.b16 %v274
        %v346 = vunpack.c.l.b16 %v275
        %v347 = vunpack.c.l.b16 %v276
        %v348 = vunpack.c.l.b16 %v277
        %v349 = vunpack.c.l.b16 %v278
        %v350 = vunpack.c.l.b16 %v279
        %v351 = vunpack.c.l.b16 %v280
        %v352 = vpack.c.b16 %v321, %v320
        %v353 = vpack.c.b16 %v323, %v322
        %v354 = vpack.c.b16 %v325, %v324
        %v355 = vpack.c.b16 %v327, %v326
        %v356 = vpack.c.b16 %v329, %v328
        %v357 = vpack.c.b16 %v331, %v330
        %v358 = vpack.c.b16 %v333, %v332
        %v359 = vpack.c.b16 %v335, %v334
        %v360 = vpack.c.b16 %v337, %v336
        %v361 = vpack.c.b16 %v339, %v338
        %v362 = vpack.c.b16 %v341, %v340
        %v363 = vpack.c.b16 %v343, %v342
        %v364 = vpack.c.b16 %v345, %v344
        %v365 = vpack.c.b16 %v347, %v346
        %v366 = vpack.c.b16 %v349, %v348
        %v367 = vpack.c.b16 %v351, %v350
        %384 = vmatpush.bf16.msra.mxu0 %v359
        %385 = vmatpush.bf16.msra.mxu0 %v358
        %386 = vmatpush.bf16.msra.mxu0 %v357
        %387 = vmatpush.bf16.msra.mxu0 %v356
        %388 = vmatpush.bf16.msra.mxu0 %v355
        %389 = vmatpush.bf16.msra.mxu0 %v354
        %390 = vmatpush.bf16.msra.mxu0 %v353
        %391 = vmatpush.bf16.msra.mxu0 %v352
        %392 = vmatmul.bf16.gmra.mxu0 %v284
        %v393 = vpop.f32.mrf.mxu0
        %v394 = vadd.f32 0.0, %v393
        %v395 = vpop.f32.mrf.mxu0
        %396 = vdwg.mxu0
        %397 = vmatpush.bf16.msra.mxu0 %v367
        %398 = vmatpush.bf16.msra.mxu0 %v366
        %399 = vmatpush.bf16.msra.mxu0 %v365
        %400 = vmatpush.bf16.msra.mxu0 %v364
        %401 = vmatpush.bf16.msra.mxu0 %v363
        %402 = vmatpush.bf16.msra.mxu0 %v362
        %403 = vmatpush.bf16.msra.mxu0 %v361
        %404 = vmatpush.bf16.msra.mxu0 %v360
        %405 = vmatmul.bf16.gmra.mxu0 %v285
        %v406 = vpop.f32.mrf.mxu0
        %v407 = vadd.f32 %v394, %v406
        %v408 = vpop.f32.mrf.mxu0
        %409 = vdwg.mxu0
        %v410 = vld [vmem:[#allocation7] sm:$0xff]
        %v411 = vadd.f32 %v407, %v410
        %412 = vst [vmem:[%s247] sm:$0xff] %v411
        %s413 = sand.u32 %s121, 1
        %s414 = scalar_lea.sflag [#allocation4], %s413
        %s415 = sand.u32 %s121, 1
        %s416 = smul.addr %s415, 8
        %s417 = scalar_lea.vmem [#allocation8], %s416
        // Predicated region
        $region45: #{tpu_custom_call.1} parent=31 // pred_check
          %p418 = pneg %p131
        $region46: #{tpu_custom_call.1} parent=31 // pred_check_branch
          %420 = sbr.rel (%p418) target = $region48
        $region47: #{tpu_custom_call.1} parent=31 // pred_region
          %422 = vsyncadd %s414, 0
          %s423 = sadd.s32 %s26, %s25
          %s424 = smul.addr %s423, 8
          %s425 = scalar_lea.hbm %s3, %s424
          %s427 = sshll.u32 %s417, 4
          %s428 = int_to_ptr.vmem [resolvable:$true] %s427
          %s429 = sshll.u32 %s425, 4
          %s430 = int_to_ptr.hbm [resolvable:$true] %s429
          %432 = dma.vmem_to_hbm [thread:$0]  %s428, 128, %s430, %s414
        $region48: #{tpu_custom_call.1} parent=31 // pred_fallthru
          _
      $region32: #{tpu_custom_call.1} parent=5 // pred_fallthru
        _
      %p433 = scmp.le.s32.totalorder 2, %s16
      // Predicated region
      $region49: #{tpu_custom_call.1} parent=5 // pred_check
        %p434 = pneg %p433
      $region50: #{tpu_custom_call.1} parent=5 // pred_check_branch
        %436 = sbr.rel (%p434) target = $region52
      $region51: #{tpu_custom_call.1} parent=5 // pred_region
        %s437 = ssub.s32 %s16, 2
        // Predicated region
        $region53: #{tpu_custom_call.1} parent=51 // pred_check
          %p438 = pneg %p137
        $region54: #{tpu_custom_call.1} parent=51 // pred_check_branch
          %440 = sbr.rel (%p438) target = $region56
        $region55: #{tpu_custom_call.1} parent=51 // pred_region
          %s441 = sand.u32 %s122, 1
          %s442 = scalar_lea.sflag [#allocation4], %s441
          %s443 = sand.u32 %s122, 1
          %s444 = smul.addr %s443, 8
          %s445 = scalar_lea.vmem [#allocation8], %s444
          %447 = dma.done %s442, 128
        $region56: #{tpu_custom_call.1} parent=51 // pred_fallthru
          _
      $region52: #{tpu_custom_call.1} parent=5 // pred_fallthru
        _
    $region6: #{tpu_custom_call.1} parent=1 // loop_footer
      %s20 = sadd.s32 1, %s16
    $region7: #{tpu_custom_call.1} parent=1 // loop_footer_branch
      %15 = sbr.rel target = $region3
    $region8: #{tpu_custom_call.1} parent=1 // loop_exit
      _
    %448 = vsyncpa [#allocation3], 1
    %s449 = scalar_lea.sflag [#allocation3], 1
    %450 = vsyncpa %s449, 1
    %451 = vsyncpa [#allocation6], 1
    %452 = vsyncpa [#allocation4], 1
    %s453 = scalar_lea.sflag [#allocation4], 1
    %454 = vsyncpa %s453, 1

</llo_original>
